<compile_context>
chip_gen: v5e
topology: v5e:2x2
jax: 0.10.0
libtpu: 0.0.40
codegen_flags: <defaults>
</compile_context>

<pallas_src>
import functools

import numpy as np
import jax
import jax.numpy as jnp
from jax import lax
from jax.experimental import pallas as pl
from jax.experimental.pallas import tpu as pltpu

SCALE = 16.971
EPS = 1e-8

# Fixed (deterministic) sobel weights, exactly as in get_state_dict().
SOBEL_H = np.array([[1.0, 0.0, -1.0],
                    [2.0, 0.0, -2.0],
                    [1.0, 0.0, -1.0]], dtype=np.float32)
SOBEL_V = np.array([[1.0, 2.0, 1.0],
                    [0.0, 0.0, 0.0],
                    [-1.0, -2.0, -1.0]], dtype=np.float32)


def _tidu_loss_kernel(p_ref, halo_ref, t_ref, out_ref, *, H, TH, W, rows_even):
    """One grid step = one (batch, row-tile).

    p_ref    : (1, 3, TH, W)     RGB row tile (original dtype).
    halo_ref : (1, 1, 3, 2, W)   row above / row below this tile (0 at borders).
    t_ref    : (1, 1, TH, W)     target row tile.
    out_ref  : (1, 1, 8, 128)    lane-dense per-tile partial sum (splatted).
    """
    r = pl.program_id(1)
    row0 = r * TH

    tar = t_ref[0, 0].astype(jnp.float32) * SCALE          # (TH, W)
    hal = halo_ref[0, 0].astype(jnp.float32)               # (3, 2, W)

    # Only needed when the last tile is partial (H % TH != 0): rows past H in
    # the block are unspecified and must be zeroed / excluded from the sum.
    if not rows_even:
        row_id = lax.broadcasted_iota(jnp.int32, (TH, W), 0)
        row_valid = row_id < (H - row0)

    zcol = jnp.zeros((TH, 1), jnp.float32)
    grad_mag = jnp.zeros((TH, W), jnp.float32)

    for c in range(3):                                     # static 3-channel loop
        xc = p_ref[0, c].astype(jnp.float32)               # (TH, W)
        if not rows_even:
            xc = jnp.where(row_valid, xc, 0.0)             # kill out-of-range rows
        top = hal[c, 0:1, :]                               # x(row0-1, :)  (or 0)
        bot = hal[c, 1:2, :]                               # x(row0+TH, :) (or 0)

        # --- vertical (sublane / row) pass of the separable sobel ---
        x_dn = jnp.concatenate([top, xc[:TH - 1, :]], axis=0)   # x(i-1, :)
        x_up = jnp.concatenate([xc[1:, :], bot], axis=0)        # x(i+1, :)
        t1 = x_dn + 2.0 * xc + x_up          # column kernel [1, 2, 1]  -> gx
        t2 = x_dn - x_up                     # column kernel [1, 0, -1] -> gy

        # --- horizontal (lane / column) pass with explicit zero edge column ---
        t1_l = jnp.concatenate([zcol, t1[:, :W - 1]], axis=1)   # t1(:, j-1)
        t1_r = jnp.concatenate([t1[:, 1:], zcol], axis=1)       # t1(:, j+1)
        t2_l = jnp.concatenate([zcol, t2[:, :W - 1]], axis=1)
        t2_r = jnp.concatenate([t2[:, 1:], zcol], axis=1)

        gx = t1_l - t1_r
        gy = t2_l + 2.0 * t2 + t2_r
        grad_mag = grad_mag + jnp.sqrt(gx * gx + gy * gy + EPS)

    diff = grad_mag - tar
    dsq = diff * diff
    if not rows_even:
        dsq = jnp.where(row_valid, dsq, 0.0)               # select also kills NaN/Inf

    partial = jnp.sum(dsq)
    out_ref[...] = jnp.full((1, 1, 8, 128), partial, dtype=jnp.float32)


def _pick_row_tile(H, W, p_item, t_item, budget_bytes, cap=512):
    """Largest row tile (multiple of 8, or H itself) fitting the VMEM budget."""
    def vmem_need(th):
        # 2x double-buffered P1/tar blocks + ~12 live (th, W) f32 temporaries.
        return 2 * 3 * th * W * p_item + 2 * th * W * t_item + 12 * th * W * 4

    if H <= cap and vmem_need(H) <= budget_bytes:
        return H
    th = max(8, min(cap, (H // 8) * 8))
    while th > 8 and vmem_need(th) > budget_bytes:
        th -= 8
    # Prefer an exact divisor of H (skips the in-kernel partial-row mask).
    for cand in range(th, max(8, th // 2) - 1, -8):
        if H % cand == 0:
            return cand
    return th


def l_adaptivesmooth(P1, tar, *, row_tile=None, vmem_budget_bytes=40 << 20):
    """Pallas implementation of L_adaptivesmooth.forward(P1, tar)."""
    B, C, H, W = P1.shape
    assert C >= 3, "tidu mode reads the first 3 channels"
    assert tar.shape == (B, 1, H, W)

    P1_rgb = P1[:, :3] if C > 3 else P1
    p_item = jnp.dtype(P1_rgb.dtype).itemsize
    t_item = jnp.dtype(tar.dtype).itemsize

    TH = row_tile if row_tile is not None else _pick_row_tile(
        H, W, p_item, t_item, vmem_budget_bytes)
    NT = pl.cdiv(H, TH)
    rows_even = (H % TH == 0)

    # Tiny 2-row halo side input: the row just above and just below every row
    # tile (zero outside the image, matching the conv 'same' zero padding).
    # Only ~2*NT rows per channel -> negligible extra HBM traffic, and it keeps
    # every main block on the automatic double-buffered BlockSpec pipeline.
    r_ids = jnp.arange(NT, dtype=jnp.int32) * TH

    def _take_rows(idx):
        rows = jnp.take(P1_rgb, jnp.clip(idx, 0, H - 1), axis=2)   # (B,3,NT,W)
        valid = ((idx >= 0) & (idx < H)).astype(P1_rgb.dtype)
        return rows * valid[None, None, :, None]

    halos = jnp.stack([_take_rows(r_ids - 1), _take_rows(r_ids + TH)], axis=3)
    halos = jnp.transpose(halos, (0, 2, 1, 3, 4))                  # (B,NT,3,2,W)

    # Generation-aware-ish VMEM limit derived from the actual tile budget
    # (stays under v7x's 64 MiB physical VMEM for the default budget).
    vmem_need = (2 * 3 * TH * W * p_item + 2 * TH * W * t_item + 12 * TH * W * 4
                 + 4 * 3 * 2 * W * p_item + (2 << 20))
    vmem_limit = int(min(max(int(vmem_need * 1.25), 32 << 20), 60 << 20))

    cost = pl.CostEstimate(flops=int(45 * B * H * W),
                           transcendentals=int(3 * B * H * W),
                           bytes_accessed=int(B * H * W * (3 * p_item + t_item)))

    kernel = functools.partial(_tidu_loss_kernel, H=H, TH=TH, W=W,
                               rows_even=rows_even)

    partials = pl.pallas_call(
        kernel,
        out_shape=jax.ShapeDtypeStruct((B, NT, 8, 128), jnp.float32),
        grid=(B, NT),
        in_specs=[
            pl.BlockSpec((1, 3, TH, W), lambda b, r: (b, 0, r, 0)),
            pl.BlockSpec((1, 1, 3, 2, W), lambda b, r: (b, r, 0, 0, 0)),
            pl.BlockSpec((1, 1, TH, W), lambda b, r: (b, 0, r, 0)),
        ],
        out_specs=pl.BlockSpec((1, 1, 8, 128), lambda b, r: (b, r, 0, 0)),
        compiler_params=pltpu.CompilerParams(
            dimension_semantics=("parallel", "parallel"),
            vmem_limit_bytes=vmem_limit),
        cost_estimate=cost,
    )(P1_rgb, halos, tar)

    total = jnp.sum(partials[:, :, 0, 0])
    return total / float(B * H * W)      # exact divisor (Python float)


def _reference_loss(P1, tar):
    """Pure-JAX reference (lax conv) matching the PyTorch forward."""
    w_h = jnp.asarray(SOBEL_H).reshape(1, 1, 3, 3)
    w_v = jnp.asarray(SOBEL_V).reshape(1, 1, 3, 3)

    def conv(x, w):
        return lax.conv_general_dilated(
            x, w, window_strides=(1, 1), padding=((1, 1), (1, 1)),
            dimension_numbers=('NCHW', 'OIHW', 'NCHW'))

    mag = jnp.zeros_like(P1[:, 0:1], dtype=jnp.float32)
    for c in range(3):
        xc = P1[:, c:c + 1].astype(jnp.float32)
        gx = conv(xc, w_h)
        gy = conv(xc, w_v)
        mag = mag + jnp.sqrt(gx * gx + gy * gy + EPS)
    return jnp.mean((mag - SCALE * tar.astype(jnp.float32)) ** 2)


if __name__ == "__main__":
    key = jax.random.PRNGKey(0)
    k1, k2, k3, k4 = jax.random.split(key, 4)

    # Case 1: single-tile path (TH == H).
    B, C, H, W = 2, 3, 16, 16
    P1 = jax.random.uniform(k1, (B, C, H, W), dtype=jnp.float32)
    tar = jax.random.uniform(k2, (B, 1, H, W), dtype=jnp.float32)
    loss = jax.block_until_ready(l_adaptivesmooth(P1, tar))
    ref = jax.block_until_ready(_reference_loss(P1, tar))
    if not np.allclose(np.asarray(loss), np.asarray(ref), rtol=1e-4, atol=1e-4):
        raise AssertionError(f"case1 mismatch: pallas={loss} ref={ref}")

    # Case 2: multi-tile path with halos and a partial last tile (H % TH != 0).
    B2, H2, W2 = 2, 20, 16
    P1b = jax.random.uniform(k3, (B2, 3, H2, W2), dtype=jnp.float32)
    tarb = jax.random.uniform(k4, (B2, 1, H2, W2), dtype=jnp.float32)
    loss2 = jax.block_until_ready(l_adaptivesmooth(P1b, tarb, row_tile=8))
    ref2 = jax.block_until_ready(_reference_loss(P1b, tarb))
    if not np.allclose(np.asarray(loss2), np.asarray(ref2), rtol=1e-4, atol=1e-4):
        raise AssertionError(f"case2 mismatch: pallas={loss2} ref={ref2}")

    print("KERNEL_OK")
</pallas_src>

<mosaic_0001>
module attributes {stable_mosaic.version = 11 : i64} {
  func.func @_tidu_loss_kernel(%arg0: i32, %arg1: i32, %arg2: memref<1x3x16x16xf32, #tpu.memory_space<vmem>>, %arg3: memref<1x1x3x2x16xf32, #tpu.memory_space<vmem>>, %arg4: memref<1x1x16x16xf32, #tpu.memory_space<vmem>>, %arg5: memref<1x1x8x128xf32, #tpu.memory_space<vmem>>) attributes {dimension_semantics = [#tpu.dimension_semantics<parallel>, #tpu.dimension_semantics<parallel>], iteration_bounds = array<i64: 2, 1>, scalar_prefetch = 0 : i64, scratch_operands = 0 : i64, tpu.core_type = #tpu.core_type<tc>, window_params = [{transform_indices = @transform_0, window_bounds = array<i64: 1, 3, 16, 16>}, {transform_indices = @transform_1, window_bounds = array<i64: 1, 1, 3, 2, 16>}, {transform_indices = @transform_2, window_bounds = array<i64: 1, 1, 16, 16>}, {transform_indices = @transform_3, window_bounds = array<i64: 1, 1, 8, 128>}]} {
    %c0 = arith.constant 0 : index
    %c0_0 = arith.constant 0 : index
    %c0_1 = arith.constant 0 : index
    %c0_2 = arith.constant 0 : index
    %0 = vector.load %arg4[%c0, %c0_0, %c0_1, %c0_2] : memref<1x1x16x16xf32, #tpu.memory_space<vmem>>, vector<1x1x16x16xf32>
    %1 = vector.shape_cast %0 : vector<1x1x16x16xf32> to vector<16x16xf32>
    %cst = arith.constant 1.697100e+01 : f32
    %2 = vector.broadcast %cst : f32 to vector<16x16xf32>
    %3 = arith.mulf %1, %2 : vector<16x16xf32>
    %c0_3 = arith.constant 0 : index
    %c0_4 = arith.constant 0 : index
    %c0_5 = arith.constant 0 : index
    %c0_6 = arith.constant 0 : index
    %c0_7 = arith.constant 0 : index
    %4 = vector.load %arg3[%c0_3, %c0_4, %c0_5, %c0_6, %c0_7] : memref<1x1x3x2x16xf32, #tpu.memory_space<vmem>>, vector<1x1x3x2x16xf32>
    %5 = vector.shape_cast %4 : vector<1x1x3x2x16xf32> to vector<3x2x16xf32>
    %cst_8 = arith.constant 0.000000e+00 : f32
    %6 = vector.broadcast %cst_8 : f32 to vector<16x1xf32>
    %cst_9 = arith.constant 0.000000e+00 : f32
    %7 = vector.broadcast %cst_9 : f32 to vector<16x16xf32>
    %c0_10 = arith.constant 0 : index
    %c0_11 = arith.constant 0 : index
    %c0_12 = arith.constant 0 : index
    %c0_13 = arith.constant 0 : index
    %8 = vector.load %arg2[%c0_10, %c0_11, %c0_12, %c0_13] : memref<1x3x16x16xf32, #tpu.memory_space<vmem>>, vector<1x1x16x16xf32>
    %9 = vector.shape_cast %8 : vector<1x1x16x16xf32> to vector<16x16xf32>
    %10 = vector.extract_strided_slice %5 {offsets = [0, 0, 0], sizes = [1, 1, 16], strides = [1, 1, 1]} : vector<3x2x16xf32> to vector<1x1x16xf32>
    %11 = vector.shape_cast %10 : vector<1x1x16xf32> to vector<1x16xf32>
    %12 = vector.extract_strided_slice %5 {offsets = [0, 1, 0], sizes = [1, 1, 16], strides = [1, 1, 1]} : vector<3x2x16xf32> to vector<1x1x16xf32>
    %13 = vector.shape_cast %12 : vector<1x1x16xf32> to vector<1x16xf32>
    %14 = vector.extract_strided_slice %9 {offsets = [0, 0], sizes = [15, 16], strides = [1, 1]} : vector<16x16xf32> to vector<15x16xf32>
    %15 = tpu.concatenate %11, %14 in 0 : vector<1x16xf32>, vector<15x16xf32> -> vector<16x16xf32>
    %16 = vector.extract_strided_slice %9 {offsets = [1, 0], sizes = [15, 16], strides = [1, 1]} : vector<16x16xf32> to vector<15x16xf32>
    %17 = tpu.concatenate %16, %13 in 0 : vector<15x16xf32>, vector<1x16xf32> -> vector<16x16xf32>
    %cst_14 = arith.constant 2.000000e+00 : f32
    %18 = vector.broadcast %cst_14 : f32 to vector<16x16xf32>
    %19 = arith.mulf %18, %9 : vector<16x16xf32>
    %20 = arith.addf %15, %19 : vector<16x16xf32>
    %21 = arith.addf %20, %17 : vector<16x16xf32>
    %22 = arith.subf %15, %17 : vector<16x16xf32>
    %23 = vector.extract_strided_slice %21 {offsets = [0, 0], sizes = [16, 15], strides = [1, 1]} : vector<16x16xf32> to vector<16x15xf32>
    %24 = tpu.concatenate %6, %23 in 1 : vector<16x1xf32>, vector<16x15xf32> -> vector<16x16xf32>
    %25 = vector.extract_strided_slice %21 {offsets = [0, 1], sizes = [16, 15], strides = [1, 1]} : vector<16x16xf32> to vector<16x15xf32>
    %26 = tpu.concatenate %25, %6 in 1 : vector<16x15xf32>, vector<16x1xf32> -> vector<16x16xf32>
    %27 = vector.extract_strided_slice %22 {offsets = [0, 0], sizes = [16, 15], strides = [1, 1]} : vector<16x16xf32> to vector<16x15xf32>
    %28 = tpu.concatenate %6, %27 in 1 : vector<16x1xf32>, vector<16x15xf32> -> vector<16x16xf32>
    %29 = vector.extract_strided_slice %22 {offsets = [0, 1], sizes = [16, 15], strides = [1, 1]} : vector<16x16xf32> to vector<16x15xf32>
    %30 = tpu.concatenate %29, %6 in 1 : vector<16x15xf32>, vector<16x1xf32> -> vector<16x16xf32>
    %31 = arith.subf %24, %26 : vector<16x16xf32>
    %cst_15 = arith.constant 2.000000e+00 : f32
    %32 = vector.broadcast %cst_15 : f32 to vector<16x16xf32>
    %33 = arith.mulf %32, %22 : vector<16x16xf32>
    %34 = arith.addf %28, %33 : vector<16x16xf32>
    %35 = arith.addf %34, %30 : vector<16x16xf32>
    %36 = arith.mulf %31, %31 : vector<16x16xf32>
    %37 = arith.mulf %35, %35 : vector<16x16xf32>
    %38 = arith.addf %36, %37 : vector<16x16xf32>
    %cst_16 = arith.constant 9.99999993E-9 : f32
    %39 = vector.broadcast %cst_16 : f32 to vector<16x16xf32>
    %40 = arith.addf %38, %39 : vector<16x16xf32>
    %41 = math.sqrt %40 : vector<16x16xf32>
    %42 = arith.addf %7, %41 : vector<16x16xf32>
    %c0_17 = arith.constant 0 : index
    %c1 = arith.constant 1 : index
    %c0_18 = arith.constant 0 : index
    %c0_19 = arith.constant 0 : index
    %43 = vector.load %arg2[%c0_17, %c1, %c0_18, %c0_19] : memref<1x3x16x16xf32, #tpu.memory_space<vmem>>, vector<1x1x16x16xf32>
    %44 = vector.shape_cast %43 : vector<1x1x16x16xf32> to vector<16x16xf32>
    %45 = vector.extract_strided_slice %5 {offsets = [1, 0, 0], sizes = [1, 1, 16], strides = [1, 1, 1]} : vector<3x2x16xf32> to vector<1x1x16xf32>
    %46 = vector.shape_cast %45 : vector<1x1x16xf32> to vector<1x16xf32>
    %47 = vector.extract_strided_slice %5 {offsets = [1, 1, 0], sizes = [1, 1, 16], strides = [1, 1, 1]} : vector<3x2x16xf32> to vector<1x1x16xf32>
    %48 = vector.shape_cast %47 : vector<1x1x16xf32> to vector<1x16xf32>
    %49 = vector.extract_strided_slice %44 {offsets = [0, 0], sizes = [15, 16], strides = [1, 1]} : vector<16x16xf32> to vector<15x16xf32>
    %50 = tpu.concatenate %46, %49 in 0 : vector<1x16xf32>, vector<15x16xf32> -> vector<16x16xf32>
    %51 = vector.extract_strided_slice %44 {offsets = [1, 0], sizes = [15, 16], strides = [1, 1]} : vector<16x16xf32> to vector<15x16xf32>
    %52 = tpu.concatenate %51, %48 in 0 : vector<15x16xf32>, vector<1x16xf32> -> vector<16x16xf32>
    %cst_20 = arith.constant 2.000000e+00 : f32
    %53 = vector.broadcast %cst_20 : f32 to vector<16x16xf32>
    %54 = arith.mulf %53, %44 : vector<16x16xf32>
    %55 = arith.addf %50, %54 : vector<16x16xf32>
    %56 = arith.addf %55, %52 : vector<16x16xf32>
    %57 = arith.subf %50, %52 : vector<16x16xf32>
    %58 = vector.extract_strided_slice %56 {offsets = [0, 0], sizes = [16, 15], strides = [1, 1]} : vector<16x16xf32> to vector<16x15xf32>
    %59 = tpu.concatenate %6, %58 in 1 : vector<16x1xf32>, vector<16x15xf32> -> vector<16x16xf32>
    %60 = vector.extract_strided_slice %56 {offsets = [0, 1], sizes = [16, 15], strides = [1, 1]} : vector<16x16xf32> to vector<16x15xf32>
    %61 = tpu.concatenate %60, %6 in 1 : vector<16x15xf32>, vector<16x1xf32> -> vector<16x16xf32>
    %62 = vector.extract_strided_slice %57 {offsets = [0, 0], sizes = [16, 15], strides = [1, 1]} : vector<16x16xf32> to vector<16x15xf32>
    %63 = tpu.concatenate %6, %62 in 1 : vector<16x1xf32>, vector<16x15xf32> -> vector<16x16xf32>
    %64 = vector.extract_strided_slice %57 {offsets = [0, 1], sizes = [16, 15], strides = [1, 1]} : vector<16x16xf32> to vector<16x15xf32>
    %65 = tpu.concatenate %64, %6 in 1 : vector<16x15xf32>, vector<16x1xf32> -> vector<16x16xf32>
    %66 = arith.subf %59, %61 : vector<16x16xf32>
    %cst_21 = arith.constant 2.000000e+00 : f32
    %67 = vector.broadcast %cst_21 : f32 to vector<16x16xf32>
    %68 = arith.mulf %67, %57 : vector<16x16xf32>
    %69 = arith.addf %63, %68 : vector<16x16xf32>
    %70 = arith.addf %69, %65 : vector<16x16xf32>
    %71 = arith.mulf %66, %66 : vector<16x16xf32>
    %72 = arith.mulf %70, %70 : vector<16x16xf32>
    %73 = arith.addf %71, %72 : vector<16x16xf32>
    %cst_22 = arith.constant 9.99999993E-9 : f32
    %74 = vector.broadcast %cst_22 : f32 to vector<16x16xf32>
    %75 = arith.addf %73, %74 : vector<16x16xf32>
    %76 = math.sqrt %75 : vector<16x16xf32>
    %77 = arith.addf %42, %76 : vector<16x16xf32>
    %c0_23 = arith.constant 0 : index
    %c2 = arith.constant 2 : index
    %c0_24 = arith.constant 0 : index
    %c0_25 = arith.constant 0 : index
    %78 = vector.load %arg2[%c0_23, %c2, %c0_24, %c0_25] : memref<1x3x16x16xf32, #tpu.memory_space<vmem>>, vector<1x1x16x16xf32>
    %79 = vector.shape_cast %78 : vector<1x1x16x16xf32> to vector<16x16xf32>
    %80 = vector.extract_strided_slice %5 {offsets = [2, 0, 0], sizes = [1, 1, 16], strides = [1, 1, 1]} : vector<3x2x16xf32> to vector<1x1x16xf32>
    %81 = vector.shape_cast %80 : vector<1x1x16xf32> to vector<1x16xf32>
    %82 = vector.extract_strided_slice %5 {offsets = [2, 1, 0], sizes = [1, 1, 16], strides = [1, 1, 1]} : vector<3x2x16xf32> to vector<1x1x16xf32>
    %83 = vector.shape_cast %82 : vector<1x1x16xf32> to vector<1x16xf32>
    %84 = vector.extract_strided_slice %79 {offsets = [0, 0], sizes = [15, 16], strides = [1, 1]} : vector<16x16xf32> to vector<15x16xf32>
    %85 = tpu.concatenate %81, %84 in 0 : vector<1x16xf32>, vector<15x16xf32> -> vector<16x16xf32>
    %86 = vector.extract_strided_slice %79 {offsets = [1, 0], sizes = [15, 16], strides = [1, 1]} : vector<16x16xf32> to vector<15x16xf32>
    %87 = tpu.concatenate %86, %83 in 0 : vector<15x16xf32>, vector<1x16xf32> -> vector<16x16xf32>
    %cst_26 = arith.constant 2.000000e+00 : f32
    %88 = vector.broadcast %cst_26 : f32 to vector<16x16xf32>
    %89 = arith.mulf %88, %79 : vector<16x16xf32>
    %90 = arith.addf %85, %89 : vector<16x16xf32>
    %91 = arith.addf %90, %87 : vector<16x16xf32>
    %92 = arith.subf %85, %87 : vector<16x16xf32>
    %93 = vector.extract_strided_slice %91 {offsets = [0, 0], sizes = [16, 15], strides = [1, 1]} : vector<16x16xf32> to vector<16x15xf32>
    %94 = tpu.concatenate %6, %93 in 1 : vector<16x1xf32>, vector<16x15xf32> -> vector<16x16xf32>
    %95 = vector.extract_strided_slice %91 {offsets = [0, 1], sizes = [16, 15], strides = [1, 1]} : vector<16x16xf32> to vector<16x15xf32>
    %96 = tpu.concatenate %95, %6 in 1 : vector<16x15xf32>, vector<16x1xf32> -> vector<16x16xf32>
    %97 = vector.extract_strided_slice %92 {offsets = [0, 0], sizes = [16, 15], strides = [1, 1]} : vector<16x16xf32> to vector<16x15xf32>
    %98 = tpu.concatenate %6, %97 in 1 : vector<16x1xf32>, vector<16x15xf32> -> vector<16x16xf32>
    %99 = vector.extract_strided_slice %92 {offsets = [0, 1], sizes = [16, 15], strides = [1, 1]} : vector<16x16xf32> to vector<16x15xf32>
    %100 = tpu.concatenate %99, %6 in 1 : vector<16x15xf32>, vector<16x1xf32> -> vector<16x16xf32>
    %101 = arith.subf %94, %96 : vector<16x16xf32>
    %cst_27 = arith.constant 2.000000e+00 : f32
    %102 = vector.broadcast %cst_27 : f32 to vector<16x16xf32>
    %103 = arith.mulf %102, %92 : vector<16x16xf32>
    %104 = arith.addf %98, %103 : vector<16x16xf32>
    %105 = arith.addf %104, %100 : vector<16x16xf32>
    %106 = arith.mulf %101, %101 : vector<16x16xf32>
    %107 = arith.mulf %105, %105 : vector<16x16xf32>
    %108 = arith.addf %106, %107 : vector<16x16xf32>
    %cst_28 = arith.constant 9.99999993E-9 : f32
    %109 = vector.broadcast %cst_28 : f32 to vector<16x16xf32>
    %110 = arith.addf %108, %109 : vector<16x16xf32>
    %111 = math.sqrt %110 : vector<16x16xf32>
    %112 = arith.addf %77, %111 : vector<16x16xf32>
    %113 = arith.subf %112, %3 : vector<16x16xf32>
    %114 = arith.mulf %113, %113 : vector<16x16xf32>
    %115 = vector.shape_cast %114 : vector<16x16xf32> to vector<1x16x16xf32>
    %cst_29 = arith.constant dense<0.000000e+00> : vector<1xf32>
    %116 = vector.multi_reduction <add>, %115, %cst_29 [1, 2] : vector<1x16x16xf32> to vector<1xf32>
    %117 = vector.shape_cast %116 : vector<1xf32> to vector<1x1x1xf32>
    %118 = vector.extract %117[0, 0, 0] : f32 from vector<1x1x1xf32>
    %119 = vector.broadcast %118 : f32 to vector<1x1x8x128xf32>
    %c0_30 = arith.constant 0 : index
    %c0_31 = arith.constant 0 : index
    %c0_32 = arith.constant 0 : index
    %c0_33 = arith.constant 0 : index
    %120 = vector.load %arg5[%c0_30, %c0_31, %c0_32, %c0_33] : memref<1x1x8x128xf32, #tpu.memory_space<vmem>>, vector<1x1x8x128xf32>
    tpu.vector_store %arg5[%c0_30, %c0_31, %c0_32, %c0_33], %119 {strides = array<i32>} : memref<1x1x8x128xf32, #tpu.memory_space<vmem>>, vector<1x1x8x128xf32>,
    return
  }
  func.func @transform_0(%arg0: i32, %arg1: i32) -> (i32, i32, i32, i32) {
    %c0_i32 = arith.constant 0 : i32
    %c0_i32_0 = arith.constant 0 : i32
    %c0_i32_1 = arith.constant 0 : i32
    return %arg0, %c0_i32, %arg1, %c0_i32_0 : i32, i32, i32, i32
  }
  func.func @transform_1(%arg0: i32, %arg1: i32) -> (i32, i32, i32, i32, i32) {
    %c0_i32 = arith.constant 0 : i32
    %c0_i32_0 = arith.constant 0 : i32
    %c0_i32_1 = arith.constant 0 : i32
    %c0_i32_2 = arith.constant 0 : i32
    return %arg0, %arg1, %c0_i32, %c0_i32_0, %c0_i32_1 : i32, i32, i32, i32, i32
  }
  func.func @transform_2(%arg0: i32, %arg1: i32) -> (i32, i32, i32, i32) {
    %c0_i32 = arith.constant 0 : i32
    %c0_i32_0 = arith.constant 0 : i32
    %c0_i32_1 = arith.constant 0 : i32
    return %arg0, %c0_i32, %arg1, %c0_i32_0 : i32, i32, i32, i32
  }
  func.func @transform_3(%arg0: i32, %arg1: i32) -> (i32, i32, i32, i32) {
    %c0_i32 = arith.constant 0 : i32
    %c0_i32_0 = arith.constant 0 : i32
    %c0_i32_1 = arith.constant 0 : i32
    return %arg0, %arg1, %c0_i32, %c0_i32_0 : i32, i32, i32, i32
  }
}

</mosaic_0001>

<llo_original>
// kernel: tpu_custom_call.1
$region0: #{tpu_custom_call.1}
  #allocation0 [shape = 'u32[]', space=smem, size = 0x4, offset = 0x4, fixed_abs, tag = 'smem constant byte address 0x4 - core index']
  #allocation1 [shape = 'u32[72,128]{1,0:T(1,128)}', space=vmem, size = 0x9000, scoped, tag = 'internal scratch']
  %s0 = inlined_call_operand.hbm [shape: f32[2,3,16,16], index: 0, kind: input, shape index: {}]
  %s1 = inlined_call_operand.hbm [shape: f32[2,1,3,2,16], index: 1, kind: input, shape index: {}]
  %s2 = inlined_call_operand.hbm [shape: f32[2,1,16,16], index: 2, kind: input, shape index: {}]
  %s3 = inlined_call_operand.hbm [shape: f32[2,1,8,128], index: 3, kind: output, shape index: {}]
  %s4 = sld [smem:[#allocation0]]
  $region57: #{tpu_custom_call.1} parent=0
    _
  %s6 = ssub.s32 1, %s4
  %s7 = scalar_select 0, %s6, %s4
  $region1: #{tpu_custom_call.1} parent=0
    #allocation2 [shape = 'u8[49152]{0}', space=vmem, size = 0xc000, scoped, tag = 'input window, operand 0']
    #allocation3 [shape = 's32[2]{0}', space=sflag, size = 0x8, scoped, tag = 'scoped memory for tpu_custom_call.1']
    #allocation4 [shape = 's32[2]{0}', space=sflag, size = 0x8, scoped, tag = 'scoped memory for tpu_custom_call.1']
    #allocation5 [shape = 'u8[6144]{0}', space=vmem, size = 0x1800, scoped, tag = 'input window, operand 1']
    #allocation6 [shape = 's32[2]{0}', space=sflag, size = 0x8, scoped, tag = 'scoped memory for tpu_custom_call.1']
    #allocation7 [shape = 'u8[16384]{0}', space=vmem, size = 0x4000, scoped, tag = 'input window, operand 2']
    #allocation8 [shape = 'u8[8192]{0}', space=vmem, size = 0x2000, scoped, tag = 'output window, operand 0']
    %8 = vsyncpa [#allocation3], 0
    %s9 = scalar_lea.sflag [#allocation3], 1
    %10 = vsyncpa %s9, 0
    %11 = vsyncpa [#allocation6], 0
    %s12 = scalar_lea.sflag [#allocation6], 1
    %13 = vsyncpa %s12, 0
    %14 = vsyncpa [#allocation4], 0
    %s15 = scalar_lea.sflag [#allocation4], 1
    %16 = vsyncpa %s15, 0
    loop: start=0, step=1, limit=4
    $region2: #{tpu_custom_call.1} parent=1 // loop_pre_header
      _
    $region3: #{tpu_custom_call.1} parent=1 // loop_header
      %s18 = sphi 0, %s22
      %p19 = scmp.ge.s32.totalorder %s18, 4
      %s25 = sphi 0, %s37
      %s26 = sphi 0, %s33
      %s27 = sphi 0, %s25
      %s28 = sphi 0, %s26
      %s29 = sphi 0, %s27
      %s30 = sphi 0, %s28
      %s42 = sphi 0, %s44
      %s45 = sphi 0, %s42
      %s46 = sphi 0, %s45
      %s62 = sphi 0, %s46
      %s70 = sphi 0, %s72
      %s73 = sphi 0, %s70
      %s74 = sphi 0, %s73
      %s90 = sphi 0, %s74
      %s98 = sphi 0, %s100
      %s101 = sphi 0, %s98
      %s102 = sphi 0, %s101
      %s118 = sphi 0, %s102
      %s126 = sphi 0, %s128
      %s129 = sphi 0, %s126
      %s130 = sphi 0, %s129
      %s146 = sphi 0, %s130
    $region4: #{tpu_custom_call.1} parent=1 // loop_header_branch
      %21 = sbr.rel (%p19) target = $region8
    $region5: #{tpu_custom_call.1} parent=1 // loop_body
      %s23 = ssub.s32 %s18, 1
      %s24 = ssub.s32 %s18, 2
      %s31 = sadd.s32 1, %s26
      %p32 = scmp.ge.s32.totalorder %s31, 1
      %s33 = scalar_select %p32, 0, %s31
      %s34 = sadd.s32 1, %s25
      %s35 = scalar_select %p32, %s34, %s25
      %p36 = scmp.ge.s32.totalorder %s35, 2
      %s37 = scalar_select %p36, 0, %s35
      %s38 = ssub.s32 %s25, %s37
      %s39 = ssub.s32 %s26, %s33
      %s40 = sor.u32 %s38, %s39
      %p41 = scmp.eq.s32.totalorder %s40, 0
      %s43 = sadd.s32 %s42, 1
      %s44 = scalar_select %p41, %s42, %s43
      %p47 = pneg %p41
      %p48 = scmp.eq.s32.totalorder %s18, 1
      %p49 = por %p47, %p48
      %p50 = scmp.ne.s32.totalorder %s42, %s45
      %p51 = scmp.eq.s32.totalorder %s18, 0
      %p52 = por %p50, %p51
      %p53 = scmp.ne.s32.totalorder %s42, %s45
      %p54 = scmp.eq.s32.totalorder %s23, 1
      %p55 = por %p53, %p54
      %p56 = scmp.ne.s32.totalorder %s45, %s46
      %p57 = scmp.eq.s32.totalorder %s23, 0
      %p58 = por %p56, %p57
      %p59 = scmp.ne.s32.totalorder %s45, %s46
      %p60 = scmp.eq.s32.totalorder %s24, 1
      %p61 = por %p59, %p60
      %p63 = scmp.ne.s32.totalorder %s46, %s62
      %p64 = scmp.eq.s32.totalorder %s24, 0
      %p65 = por %p63, %p64
      %s66 = ssub.s32 %s25, %s37
      %s67 = ssub.s32 %s26, %s33
      %s68 = sor.u32 %s66, %s67
      %p69 = scmp.eq.s32.totalorder %s68, 0
      %s71 = sadd.s32 %s70, 1
      %s72 = scalar_select %p69, %s70, %s71
      %p75 = pneg %p69
      %p76 = scmp.eq.s32.totalorder %s18, 1
      %p77 = por %p75, %p76
      %p78 = scmp.ne.s32.totalorder %s70, %s73
      %p79 = scmp.eq.s32.totalorder %s18, 0
      %p80 = por %p78, %p79
      %p81 = scmp.ne.s32.totalorder %s70, %s73
      %p82 = scmp.eq.s32.totalorder %s23, 1
      %p83 = por %p81, %p82
      %p84 = scmp.ne.s32.totalorder %s73, %s74
      %p85 = scmp.eq.s32.totalorder %s23, 0
      %p86 = por %p84, %p85
      %p87 = scmp.ne.s32.totalorder %s73, %s74
      %p88 = scmp.eq.s32.totalorder %s24, 1
      %p89 = por %p87, %p88
      %p91 = scmp.ne.s32.totalorder %s74, %s90
      %p92 = scmp.eq.s32.totalorder %s24, 0
      %p93 = por %p91, %p92
      %s94 = ssub.s32 %s25, %s37
      %s95 = ssub.s32 %s26, %s33
      %s96 = sor.u32 %s94, %s95
      %p97 = scmp.eq.s32.totalorder %s96, 0
      %s99 = sadd.s32 %s98, 1
      %s100 = scalar_select %p97, %s98, %s99
      %p103 = pneg %p97
      %p104 = scmp.eq.s32.totalorder %s18, 1
      %p105 = por %p103, %p104
      %p106 = scmp.ne.s32.totalorder %s98, %s101
      %p107 = scmp.eq.s32.totalorder %s18, 0
      %p108 = por %p106, %p107
      %p109 = scmp.ne.s32.totalorder %s98, %s101
      %p110 = scmp.eq.s32.totalorder %s23, 1
      %p111 = por %p109, %p110
      %p112 = scmp.ne.s32.totalorder %s101, %s102
      %p113 = scmp.eq.s32.totalorder %s23, 0
      %p114 = por %p112, %p113
      %p115 = scmp.ne.s32.totalorder %s101, %s102
      %p116 = scmp.eq.s32.totalorder %s24, 1
      %p117 = por %p115, %p116
      %p119 = scmp.ne.s32.totalorder %s102, %s118
      %p120 = scmp.eq.s32.totalorder %s24, 0
      %p121 = por %p119, %p120
      %s122 = ssub.s32 %s25, %s37
      %s123 = ssub.s32 %s26, %s33
      %s124 = sor.u32 %s122, %s123
      %p125 = scmp.eq.s32.totalorder %s124, 0
      %s127 = sadd.s32 %s126, 1
      %s128 = scalar_select %p125, %s126, %s127
      %p131 = pneg %p125
      %p132 = scmp.eq.s32.totalorder %s18, 1
      %p133 = por %p131, %p132
      %p134 = scmp.ne.s32.totalorder %s126, %s129
      %p135 = scmp.eq.s32.totalorder %s18, 0
      %p136 = por %p134, %p135
      %p137 = scmp.ne.s32.totalorder %s126, %s129
      %p138 = scmp.eq.s32.totalorder %s23, 1
      %p139 = por %p137, %p138
      %p140 = scmp.ne.s32.totalorder %s129, %s130
      %p141 = scmp.eq.s32.totalorder %s23, 0
      %p142 = por %p140, %p141
      %p143 = scmp.ne.s32.totalorder %s129, %s130
      %p144 = scmp.eq.s32.totalorder %s24, 1
      %p145 = por %p143, %p144
      %p147 = scmp.ne.s32.totalorder %s130, %s146
      %p148 = scmp.eq.s32.totalorder %s24, 0
      %p149 = por %p147, %p148
      %p150 = scmp.le.s32.totalorder 1, %s18
      %p151 = scmp.lt.s32.totalorder %s18, 3
      %p152 = pnand %p150, %p151
      %p153 = pneg %p152
      // Predicated region
      $region9: #{tpu_custom_call.1} parent=5 // pred_check
        _
      $region10: #{tpu_custom_call.1} parent=5 // pred_check_branch
        %155 = sbr.rel (%p152) target = $region12
      $region11: #{tpu_custom_call.1} parent=5 // pred_region
        %s156 = ssub.s32 %s18, 1
      $region12: #{tpu_custom_call.1} parent=5 // pred_fallthru
        _
      %p157 = scmp.lt.s32.totalorder %s18, 2
      // Predicated region
      $region13: #{tpu_custom_call.1} parent=5 // pred_check
        %p158 = pneg %p157
      $region14: #{tpu_custom_call.1} parent=5 // pred_check_branch
        %160 = sbr.rel (%p158) target = $region16
      $region15: #{tpu_custom_call.1} parent=5 // pred_region
        // Predicated region
        $region17: #{tpu_custom_call.1} parent=15 // pred_check
          %p161 = pneg %p52
        $region18: #{tpu_custom_call.1} parent=15 // pred_check_branch
          %163 = sbr.rel (%p161) target = $region20
        $region19: #{tpu_custom_call.1} parent=15 // pred_region
          %s164 = sand.u32 %s42, 1
          %s165 = scalar_lea.sflag [#allocation3], %s164
          %s166 = sand.u32 %s42, 1
          %s167 = smul.addr %s166, 48
          %s168 = scalar_lea.vmem [#allocation2], %s167
          %s169 = smul.u32 2, %s26
          %171 = vsyncadd %s165, 0
          %s172 = smul.addr %s25, 6
          %s173 = sadd.s32 %s169, %s172
          %s174 = smul.addr %s173, 8
          %s175 = scalar_lea.hbm %s0, %s174
          %s176 = sshll.u32 %s175, 4
          %s177 = int_to_ptr.hbm [resolvable:$true] %s176
          %s178 = sshll.u32 %s168, 4
          %s179 = int_to_ptr.vmem [resolvable:$true] %s178
          %184 = dma.hbm_to_vmem [thread:$0]  %s177, 768, %s179, %s165, 128, 128, 8
        $region20: #{tpu_custom_call.1} parent=15 // pred_fallthru
          _
        // Predicated region
        $region21: #{tpu_custom_call.1} parent=15 // pred_check
          %p185 = pneg %p80
        $region22: #{tpu_custom_call.1} parent=15 // pred_check_branch
          %187 = sbr.rel (%p185) target = $region24
        $region23: #{tpu_custom_call.1} parent=15 // pred_region
          %s188 = sand.u32 %s18, 1
          %s189 = scalar_lea.sflag [#allocation6], %s188
          %s190 = sand.u32 %s70, 1
          %s191 = smul.addr %s190, 6
          %s192 = scalar_lea.vmem [#allocation5], %s191
          %194 = vsyncadd %s189, 0
          %s195 = smul.addr %s26, 3
          %s196 = smul.addr %s25, 3
          %s197 = sadd.s32 %s195, %s196
          %s198 = smul.addr %s197, 2
          %s199 = scalar_lea.hbm %s1, %s198
          %s200 = sshll.u32 %s199, 4
          %s201 = int_to_ptr.hbm [resolvable:$true] %s200
          %s202 = sshll.u32 %s192, 4
          %s203 = int_to_ptr.vmem [resolvable:$true] %s202
          %208 = dma.hbm_to_vmem [thread:$0]  %s201, 96, %s203, %s189, 32, 32, 2
        $region24: #{tpu_custom_call.1} parent=15 // pred_fallthru
          _
        // Predicated region
        $region25: #{tpu_custom_call.1} parent=15 // pred_check
          %p209 = pneg %p108
        $region26: #{tpu_custom_call.1} parent=15 // pred_check_branch
          %211 = sbr.rel (%p209) target = $region28
        $region27: #{tpu_custom_call.1} parent=15 // pred_region
          %s212 = sand.u32 %s18, 1
          %s213 = scalar_lea.sflag [#allocation6], %s212
          %s214 = sand.u32 %s98, 1
          %s215 = smul.addr %s214, 16
          %s216 = scalar_lea.vmem [#allocation7], %s215
          %s217 = smul.u32 2, %s26
          %219 = vsyncadd %s213, 0
          %s220 = smul.addr %s25, 2
          %s221 = sadd.s32 %s217, %s220
          %s222 = smul.addr %s221, 8
          %s223 = scalar_lea.hbm %s2, %s222
          %s224 = sshll.u32 %s223, 4
          %s225 = int_to_ptr.hbm [resolvable:$true] %s224
          %s226 = sshll.u32 %s216, 4
          %s227 = int_to_ptr.vmem [resolvable:$true] %s226
          %232 = dma.hbm_to_vmem [thread:$0]  %s225, 256, %s227, %s213, 128, 128, 8
        $region28: #{tpu_custom_call.1} parent=15 // pred_fallthru
          _
      $region16: #{tpu_custom_call.1} parent=5 // pred_fallthru
        _
      %p233 = scmp.le.s32.totalorder 1, %s18
      %p234 = scmp.lt.s32.totalorder %s18, 3
      %p235 = pnand %p233, %p234
      %p236 = pneg %p235
      // Predicated region
      $region29: #{tpu_custom_call.1} parent=5 // pred_check
        _
      $region30: #{tpu_custom_call.1} parent=5 // pred_check_branch
        %238 = sbr.rel (%p235) target = $region32
      $region31: #{tpu_custom_call.1} parent=5 // pred_region
        %s239 = ssub.s32 %s18, 1
        %s240 = sand.u32 %s45, 1
        %s241 = scalar_lea.sflag [#allocation3], %s240
        %s242 = sand.u32 %s45, 1
        %s243 = smul.addr %s242, 48
        %s244 = scalar_lea.vmem [#allocation2], %s243
        // Predicated region
        $region33: #{tpu_custom_call.1} parent=31 // pred_check
          %p245 = pneg %p58
        $region34: #{tpu_custom_call.1} parent=31 // pred_check_branch
          %247 = sbr.rel (%p245) target = $region36
        $region35: #{tpu_custom_call.1} parent=31 // pred_region
          %249 = dma.done %s241, 768
        $region36: #{tpu_custom_call.1} parent=31 // pred_fallthru
          _
        %s250 = sand.u32 %s23, 1
        %s251 = scalar_lea.sflag [#allocation6], %s250
        %s252 = sand.u32 %s73, 1
        %s253 = smul.addr %s252, 6
        %s254 = scalar_lea.vmem [#allocation5], %s253
        // Predicated region
        $region37: #{tpu_custom_call.1} parent=31 // pred_check
          %p255 = pneg %p86
        $region38: #{tpu_custom_call.1} parent=31 // pred_check_branch
          %257 = sbr.rel (%p255) target = $region40
        $region39: #{tpu_custom_call.1} parent=31 // pred_region
          %259 = dma.done %s251, 96
        $region40: #{tpu_custom_call.1} parent=31 // pred_fallthru
          _
        %s260 = sand.u32 %s23, 1
        %s261 = scalar_lea.sflag [#allocation6], %s260
        %s262 = sand.u32 %s101, 1
        %s263 = smul.addr %s262, 16
        %s264 = scalar_lea.vmem [#allocation7], %s263
        // Predicated region
        $region41: #{tpu_custom_call.1} parent=31 // pred_check
          %p265 = pneg %p114
        $region42: #{tpu_custom_call.1} parent=31 // pred_check_branch
          %267 = sbr.rel (%p265) target = $region44
        $region43: #{tpu_custom_call.1} parent=31 // pred_region
          %269 = dma.done %s261, 256
        $region44: #{tpu_custom_call.1} parent=31 // pred_fallthru
          _
        %s270 = sand.u32 %s45, 1
        %s271 = scalar_lea.sflag [#allocation3], %s270
        %s272 = sand.u32 %s45, 1
        %s273 = smul.addr %s272, 48
        %s274 = scalar_lea.vmem [#allocation2], %s273
        %p275 = pneg %p58
        %p276 = pneg %p55
        %s277 = sand.u32 %s23, 1
        %s278 = scalar_lea.sflag [#allocation6], %s277
        %s279 = sand.u32 %s73, 1
        %s280 = smul.addr %s279, 6
        %s281 = scalar_lea.vmem [#allocation5], %s280
        %p282 = pneg %p86
        %p283 = pneg %p83
        %s284 = sand.u32 %s23, 1
        %s285 = scalar_lea.sflag [#allocation6], %s284
        %s286 = sand.u32 %s101, 1
        %s287 = smul.addr %s286, 16
        %s288 = scalar_lea.vmem [#allocation7], %s287
        %p289 = pneg %p114
        %p290 = pneg %p111
        %p291 = pneg %p142
        %p292 = pneg %p139
        %s293 = sand.u32 %s129, 1
        %s294 = scalar_lea.sflag [#allocation4], %s293
        %s295 = sand.u32 %s129, 1
        %s296 = smul.addr %s295, 8
        %s297 = scalar_lea.vmem [#allocation8], %s296
        %s298 = smul.u32 2, %s28
        %s299 = smul.u32 2, %s28
        %v300 = vld [vmem:[%s264] sm:$0xff]
        %v301 = vld [vmem:[%s264 + $0x8] sm:$0xff]
        %v302 = vmul.f32 %v300, 16.971
        %v303 = vmul.f32 %v301, 16.971
        %v304 = vld [vmem:[%s254] sm:$0x3]
        %v305 = vld [vmem:[%s254 + $0x2] sm:$0x3]
        %v306 = vld [vmem:[%s254 + $0x4] sm:$0x3]
        %v307 = vld [vmem:[%s244] sm:$0xff]
        %v308 = vld [vmem:[%s244 + $0x8] sm:$0xff]
        %vm311 = vcmask 1040384
        %v312 = vrot.slane %v307, 7
        %v313 = vrot.slane %v308, 7
        %v314 = vsel %vm311, %v312, %v313
        %v317 = vsel %vm311, %v304, %v312
        %vm318 = vcmask 1046528
        %v319 = vrot.slane %v307, 1
        %v320 = vrot.slane %v308, 1
        %v321 = vsel %vm318, %v319, %v320
        %v325 = vrot.slane %v304, 2
        %v327 = vsel %vm318, %v320, %v325
        %v328 = vmul.f32 %v307, 2.0
        %v329 = vmul.f32 %v308, 2.0
        %v330 = vadd.f32 %v317, %v328
        %v331 = vadd.f32 %v314, %v329
        %v332 = vadd.f32 %v330, %v321
        %v333 = vadd.f32 %v331, %v327
        %v334 = vsub.f32 %v317, %v321
        %v335 = vsub.f32 %v314, %v327
        %338 = vrot.lane.b32.xlu0 %v332, 1
        %v339 = vpop.permute.xlu0 %338
        %340 = vrot.lane.b32.xlu0 %v333, 1
        %v341 = vpop.permute.xlu0 %340
        %vm344 = vcmask 7168
        %v345 = vsel %vm344, 0.0, %v339
        %v346 = vsel %vm344, 0.0, %v341
        %347 = vrot.lane.b32.xlu0 %v332, 127
        %v348 = vpop.permute.xlu0 %347
        %349 = vrot.lane.b32.xlu0 %v333, 127
        %v350 = vpop.permute.xlu0 %349
        %vm353 = vcmask 121856
        %v354 = vsel %vm353, %v348, 0.0
        %v355 = vsel %vm353, %v350, 0.0
        %358 = vrot.lane.b32.xlu0 %v334, 1
        %v359 = vpop.permute.xlu0 %358
        %360 = vrot.lane.b32.xlu0 %v335, 1
        %v361 = vpop.permute.xlu0 %360
        %v364 = vsel %vm344, 0.0, %v359
        %v365 = vsel %vm344, 0.0, %v361
        %366 = vrot.lane.b32.xlu0 %v334, 127
        %v367 = vpop.permute.xlu0 %366
        %368 = vrot.lane.b32.xlu0 %v335, 127
        %v369 = vpop.permute.xlu0 %368
        %v372 = vsel %vm353, %v367, 0.0
        %v373 = vsel %vm353, %v369, 0.0
        %v374 = vsub.f32 %v345, %v354
        %v375 = vsub.f32 %v346, %v355
        %v376 = vmul.f32 %v334, 2.0
        %v377 = vmul.f32 %v335, 2.0
        %v378 = vadd.f32 %v364, %v376
        %v379 = vadd.f32 %v365, %v377
        %v380 = vadd.f32 %v378, %v372
        %v381 = vadd.f32 %v379, %v373
        %v382 = vmul.f32 %v374, %v374
        %v383 = vmul.f32 %v375, %v375
        %v384 = vmul.f32 %v380, %v380
        %v385 = vmul.f32 %v381, %v381
        %v386 = vadd.f32 %v382, %v384
        %v387 = vadd.f32 %v383, %v385
        %v388 = vadd.f32 %v386, 1e-08
        %v389 = vadd.f32 %v387, 1e-08
        %v390 = vrsqrt.pop %v388
        %v391 = vmul.f32 %v390, %v388
        %v392 = vmul.f32 %v391, %v390
        %v393 = vmul.f32 0.5, %v392
        %v394 = vsub.f32 1.5, %v393
        %v395 = vmul.f32 %v390, %v394
        %v396 = vmul.f32 %v388, %v395
        %vm397 = vcmp.eq.f32.partialorder %v388, inf
        %v398 = vsel %vm397, %v388, %v396
        %vm399 = vcmp.eq.f32.partialorder %v388, 0.0
        %v400 = vand.u32 %v388, 2147483648
        %v401 = vsel %vm399, %v400, %v398
        %v402 = vrsqrt.pop %v389
        %v403 = vmul.f32 %v402, %v389
        %v404 = vmul.f32 %v403, %v402
        %v405 = vmul.f32 0.5, %v404
        %v406 = vsub.f32 1.5, %v405
        %v407 = vmul.f32 %v402, %v406
        %v408 = vmul.f32 %v389, %v407
        %vm409 = vcmp.eq.f32.partialorder %v389, inf
        %v410 = vsel %vm409, %v389, %v408
        %vm411 = vcmp.eq.f32.partialorder %v389, 0.0
        %v412 = vand.u32 %v389, 2147483648
        %v413 = vsel %vm411, %v412, %v410
        %v414 = vadd.f32 %v401, 0.0
        %v415 = vadd.f32 %v413, 0.0
        %s416 = scalar_lea.vmem %s244, 16 [#allocation2]
        %v417 = vld [vmem:[%s416] sm:$0xff]
        %v418 = vld [vmem:[%s416 + $0x8] sm:$0xff]
        %v421 = vrot.slane %v417, 7
        %v422 = vrot.slane %v418, 7
        %v423 = vsel %vm311, %v421, %v422
        %v426 = vsel %vm311, %v305, %v421
        %v427 = vrot.slane %v417, 1
        %v428 = vrot.slane %v418, 1
        %v429 = vsel %vm318, %v427, %v428
        %v433 = vrot.slane %v305, 2
        %v435 = vsel %vm318, %v428, %v433
        %v436 = vmul.f32 %v417, 2.0
        %v437 = vmul.f32 %v418, 2.0
        %v438 = vadd.f32 %v426, %v436
        %v439 = vadd.f32 %v423, %v437
        %v440 = vadd.f32 %v438, %v429
        %v441 = vadd.f32 %v439, %v435
        %v442 = vsub.f32 %v426, %v429
        %v443 = vsub.f32 %v423, %v435
        %446 = vrot.lane.b32.xlu0 %v440, 1
        %v447 = vpop.permute.xlu0 %446
        %448 = vrot.lane.b32.xlu0 %v441, 1
        %v449 = vpop.permute.xlu0 %448
        %v452 = vsel %vm344, 0.0, %v447
        %v453 = vsel %vm344, 0.0, %v449
        %454 = vrot.lane.b32.xlu0 %v440, 127
        %v455 = vpop.permute.xlu0 %454
        %456 = vrot.lane.b32.xlu0 %v441, 127
        %v457 = vpop.permute.xlu0 %456
        %v460 = vsel %vm353, %v455, 0.0
        %v461 = vsel %vm353, %v457, 0.0
        %464 = vrot.lane.b32.xlu0 %v442, 1
        %v465 = vpop.permute.xlu0 %464
        %466 = vrot.lane.b32.xlu0 %v443, 1
        %v467 = vpop.permute.xlu0 %466
        %v470 = vsel %vm344, 0.0, %v465
        %v471 = vsel %vm344, 0.0, %v467
        %472 = vrot.lane.b32.xlu0 %v442, 127
        %v473 = vpop.permute.xlu0 %472
        %474 = vrot.lane.b32.xlu0 %v443, 127
        %v475 = vpop.permute.xlu0 %474
        %v478 = vsel %vm353, %v473, 0.0
        %v479 = vsel %vm353, %v475, 0.0
        %v480 = vsub.f32 %v452, %v460
        %v481 = vsub.f32 %v453, %v461
        %v482 = vmul.f32 %v442, 2.0
        %v483 = vmul.f32 %v443, 2.0
        %v484 = vadd.f32 %v470, %v482
        %v485 = vadd.f32 %v471, %v483
        %v486 = vadd.f32 %v484, %v478
        %v487 = vadd.f32 %v485, %v479
        %v488 = vmul.f32 %v480, %v480
        %v489 = vmul.f32 %v481, %v481
        %v490 = vmul.f32 %v486, %v486
        %v491 = vmul.f32 %v487, %v487
        %v492 = vadd.f32 %v488, %v490
        %v493 = vadd.f32 %v489, %v491
        %v494 = vadd.f32 %v492, 1e-08
        %v495 = vadd.f32 %v493, 1e-08
        %v496 = vrsqrt.pop %v494
        %v497 = vmul.f32 %v496, %v494
        %v498 = vmul.f32 %v497, %v496
        %v499 = vmul.f32 0.5, %v498
        %v500 = vsub.f32 1.5, %v499
        %v501 = vmul.f32 %v496, %v500
        %v502 = vmul.f32 %v494, %v501
        %vm503 = vcmp.eq.f32.partialorder %v494, inf
        %v504 = vsel %vm503, %v494, %v502
        %vm505 = vcmp.eq.f32.partialorder %v494, 0.0
        %v506 = vand.u32 %v494, 2147483648
        %v507 = vsel %vm505, %v506, %v504
        %v508 = vrsqrt.pop %v495
        %v509 = vmul.f32 %v508, %v495
        %v510 = vmul.f32 %v509, %v508
        %v511 = vmul.f32 0.5, %v510
        %v512 = vsub.f32 1.5, %v511
        %v513 = vmul.f32 %v508, %v512
        %v514 = vmul.f32 %v495, %v513
        %vm515 = vcmp.eq.f32.partialorder %v495, inf
        %v516 = vsel %vm515, %v495, %v514
        %vm517 = vcmp.eq.f32.partialorder %v495, 0.0
        %v518 = vand.u32 %v495, 2147483648
        %v519 = vsel %vm517, %v518, %v516
        %v520 = vadd.f32 %v414, %v507
        %v521 = vadd.f32 %v415, %v519
        %s522 = scalar_lea.vmem %s244, 32 [#allocation2]
        %v523 = vld [vmem:[%s522] sm:$0xff]
        %v524 = vld [vmem:[%s522 + $0x8] sm:$0xff]
        %v527 = vrot.slane %v523, 7
        %v528 = vrot.slane %v524, 7
        %v529 = vsel %vm311, %v527, %v528
        %v532 = vsel %vm311, %v306, %v527
        %v533 = vrot.slane %v523, 1
        %v534 = vrot.slane %v524, 1
        %v535 = vsel %vm318, %v533, %v534
        %v539 = vrot.slane %v306, 2
        %v541 = vsel %vm318, %v534, %v539
        %v542 = vmul.f32 %v523, 2.0
        %v543 = vmul.f32 %v524, 2.0
        %v544 = vadd.f32 %v532, %v542
        %v545 = vadd.f32 %v529, %v543
        %v546 = vadd.f32 %v544, %v535
        %v547 = vadd.f32 %v545, %v541
        %v548 = vsub.f32 %v532, %v535
        %v549 = vsub.f32 %v529, %v541
        %552 = vrot.lane.b32.xlu0 %v546, 1
        %v553 = vpop.permute.xlu0 %552
        %554 = vrot.lane.b32.xlu0 %v547, 1
        %v555 = vpop.permute.xlu0 %554
        %v558 = vsel %vm344, 0.0, %v553
        %v559 = vsel %vm344, 0.0, %v555
        %560 = vrot.lane.b32.xlu0 %v546, 127
        %v561 = vpop.permute.xlu0 %560
        %562 = vrot.lane.b32.xlu0 %v547, 127
        %v563 = vpop.permute.xlu0 %562
        %v566 = vsel %vm353, %v561, 0.0
        %v567 = vsel %vm353, %v563, 0.0
        %570 = vrot.lane.b32.xlu0 %v548, 1
        %v571 = vpop.permute.xlu0 %570
        %572 = vrot.lane.b32.xlu0 %v549, 1
        %v573 = vpop.permute.xlu0 %572
        %v576 = vsel %vm344, 0.0, %v571
        %v577 = vsel %vm344, 0.0, %v573
        %578 = vrot.lane.b32.xlu0 %v548, 127
        %v579 = vpop.permute.xlu0 %578
        %580 = vrot.lane.b32.xlu0 %v549, 127
        %v581 = vpop.permute.xlu0 %580
        %v584 = vsel %vm353, %v579, 0.0
        %v585 = vsel %vm353, %v581, 0.0
        %v586 = vsub.f32 %v558, %v566
        %v587 = vsub.f32 %v559, %v567
        %v588 = vmul.f32 %v548, 2.0
        %v589 = vmul.f32 %v549, 2.0
        %v590 = vadd.f32 %v576, %v588
        %v591 = vadd.f32 %v577, %v589
        %v592 = vadd.f32 %v590, %v584
        %v593 = vadd.f32 %v591, %v585
        %v594 = vmul.f32 %v586, %v586
        %v595 = vmul.f32 %v587, %v587
        %v596 = vmul.f32 %v592, %v592
        %v597 = vmul.f32 %v593, %v593
        %v598 = vadd.f32 %v594, %v596
        %v599 = vadd.f32 %v595, %v597
        %v600 = vadd.f32 %v598, 1e-08
        %v601 = vadd.f32 %v599, 1e-08
        %v602 = vrsqrt.pop %v600
        %v603 = vmul.f32 %v602, %v600
        %v604 = vmul.f32 %v603, %v602
        %v605 = vmul.f32 0.5, %v604
        %v606 = vsub.f32 1.5, %v605
        %v607 = vmul.f32 %v602, %v606
        %v608 = vmul.f32 %v600, %v607
        %vm609 = vcmp.eq.f32.partialorder %v600, inf
        %v610 = vsel %vm609, %v600, %v608
        %vm611 = vcmp.eq.f32.partialorder %v600, 0.0
        %v612 = vand.u32 %v600, 2147483648
        %v613 = vsel %vm611, %v612, %v610
        %v614 = vrsqrt.pop %v601
        %v615 = vmul.f32 %v614, %v601
        %v616 = vmul.f32 %v615, %v614
        %v617 = vmul.f32 0.5, %v616
        %v618 = vsub.f32 1.5, %v617
        %v619 = vmul.f32 %v614, %v618
        %v620 = vmul.f32 %v601, %v619
        %vm621 = vcmp.eq.f32.partialorder %v601, inf
        %v622 = vsel %vm621, %v601, %v620
        %vm623 = vcmp.eq.f32.partialorder %v601, 0.0
        %v624 = vand.u32 %v601, 2147483648
        %v625 = vsel %vm623, %v624, %v622
        %v626 = vadd.f32 %v520, %v613
        %v627 = vadd.f32 %v521, %v625
        %v628 = vsub.f32 %v626, %v302
        %v629 = vsub.f32 %v627, %v303
        %v630 = vmul.f32 %v628, %v628
        %v631 = vmul.f32 %v629, %v629
        %vm632 = vcmask 130048
        %v633 = vsel %vm632, %v630, 0.0
        %v634 = vsel %vm632, %v631, 0.0
        %v635 = vadd.f32 %v633, %v634
        %636 = vadd.xlane.f32.xlu0 %v635
        %v637 = vpop.xlane.xlu0 %636
        %v638 = vrot.slane %v637, 4
        %v639 = vadd.f32 %v637, %v638
        %v640 = vrot.slane %v639, 2
        %v641 = vadd.f32 %v639, %v640
        %v642 = vrot.slane %v641, 1
        %v643 = vadd.f32 %v641, %v642
        %s644 = vtos %v643
        %v645 = vstv %s644
        %646 = vst [vmem:[%s297] sm:$0xff] %v645
        %s647 = sand.u32 %s129, 1
        %s648 = scalar_lea.sflag [#allocation4], %s647
        %s649 = sand.u32 %s129, 1
        %s650 = smul.addr %s649, 8
        %s651 = scalar_lea.vmem [#allocation8], %s650
        // Predicated region
        $region45: #{tpu_custom_call.1} parent=31 // pred_check
          %p652 = pneg %p139
        $region46: #{tpu_custom_call.1} parent=31 // pred_check_branch
          %654 = sbr.rel (%p652) target = $region48
        $region47: #{tpu_custom_call.1} parent=31 // pred_region
          %656 = vsyncadd %s648, 0
          %s657 = sadd.s32 %s28, %s27
          %s658 = smul.addr %s657, 8
          %s659 = scalar_lea.hbm %s3, %s658
          %s661 = sshll.u32 %s651, 4
          %s662 = int_to_ptr.vmem [resolvable:$true] %s661
          %s663 = sshll.u32 %s659, 4
          %s664 = int_to_ptr.hbm [resolvable:$true] %s663
          %666 = dma.vmem_to_hbm [thread:$0]  %s662, 128, %s664, %s648
        $region48: #{tpu_custom_call.1} parent=31 // pred_fallthru
          _
      $region32: #{tpu_custom_call.1} parent=5 // pred_fallthru
        _
      %p667 = scmp.le.s32.totalorder 2, %s18
      // Predicated region
      $region49: #{tpu_custom_call.1} parent=5 // pred_check
        %p668 = pneg %p667
      $region50: #{tpu_custom_call.1} parent=5 // pred_check_branch
        %670 = sbr.rel (%p668) target = $region52
      $region51: #{tpu_custom_call.1} parent=5 // pred_region
        %s671 = ssub.s32 %s18, 2
        // Predicated region
        $region53: #{tpu_custom_call.1} parent=51 // pred_check
          %p672 = pneg %p145
        $region54: #{tpu_custom_call.1} parent=51 // pred_check_branch
          %674 = sbr.rel (%p672) target = $region56
        $region55: #{tpu_custom_call.1} parent=51 // pred_region
          %s675 = sand.u32 %s130, 1
          %s676 = scalar_lea.sflag [#allocation4], %s675
          %s677 = sand.u32 %s130, 1
          %s678 = smul.addr %s677, 8
          %s679 = scalar_lea.vmem [#allocation8], %s678
          %681 = dma.done %s676, 128
        $region56: #{tpu_custom_call.1} parent=51 // pred_fallthru
          _
      $region52: #{tpu_custom_call.1} parent=5 // pred_fallthru
        _
    $region6: #{tpu_custom_call.1} parent=1 // loop_footer
      %s22 = sadd.s32 1, %s18
    $region7: #{tpu_custom_call.1} parent=1 // loop_footer_branch
      %17 = sbr.rel target = $region3
    $region8: #{tpu_custom_call.1} parent=1 // loop_exit
      _
    %682 = vsyncpa [#allocation3], 1
    %s683 = scalar_lea.sflag [#allocation3], 1
    %684 = vsyncpa %s683, 1
    %685 = vsyncpa [#allocation6], 1
    %s686 = scalar_lea.sflag [#allocation6], 1
    %687 = vsyncpa %s686, 1
    %688 = vsyncpa [#allocation4], 1
    %s689 = scalar_lea.sflag [#allocation4], 1
    %690 = vsyncpa %s689, 1

</llo_original>
